<compile_context>
chip_gen: v7x
topology: tpu7x:2x2x1
jax: 0.10.0
libtpu: 0.0.40
codegen_flags: <defaults>
</compile_context>

<pallas_src>
import functools

import jax
import jax.numpy as jnp
from jax.experimental import pallas as pl
from jax.experimental.pallas import tpu as pltpu

_LANE = 128


def _round_up(x, m):
    return ((x + m - 1) // m) * m


def _leaky_relu(x, negative_slope=0.01):
    # PyTorch nn.LeakyReLU() default negative_slope = 0.01
    return jnp.where(x > 0, x, negative_slope * x)


def actor_critic_kernel(x_ref,
                        w1_ref, b1_ref,
                        w2_ref, b2_ref,
                        wh_ref, bh_ref,
                        out_ref):
    # MXU input dtype follows the weights (f32 or bf16); accumulation, bias add
    # and LeakyReLU are always f32.
    cdt = w1_ref.dtype

    x = x_ref[...].astype(cdt)

    # fc1 + LeakyReLU  (x contracts over the unpadded state_dim)
    h1 = jnp.dot(x, w1_ref[...], preferred_element_type=jnp.float32) + b1_ref[...]
    h1 = _leaky_relu(h1)

    # dropout(0.5): identity in eval mode
    # TODO(synk): training-mode dropout (Bernoulli mask via pltpu.prng_*) not implemented.

    # fc2 + LeakyReLU
    h2 = jnp.dot(h1.astype(cdt), w2_ref[...],
                 preferred_element_type=jnp.float32) + b2_ref[...]
    h2 = _leaky_relu(h2)

    # fused actor|critic head: one lane-dense matmul + unmasked store
    out = jnp.dot(h2.astype(cdt), wh_ref[...],
                  preferred_element_type=jnp.float32) + bh_ref[...]
    out_ref[...] = out.astype(out_ref.dtype)


def prepare_padded_params(params, weight_dtype=jnp.float32):
    """Pad hidden / head feature dims to 128 lanes and fuse actor|critic heads.

    params: (w1, b1, w2, b2, wa, ba, wc, bc) with W in [in, out] layout
            (transposed vs. PyTorch), b in [1, out].
    fc1's input dim (state_dim) is left UNPADDED so x can stream unpadded.
    Padded rows/cols are zero so results are exact after output slicing.
    """
    w1, b1, w2, b2, wa, ba, wc, bc = params
    state_dim, hidden_dim = w1.shape
    action_dim = wa.shape[1]

    hp = _round_up(hidden_dim, _LANE)
    op = _round_up(action_dim + 1, _LANE)   # fused head: logits | value

    def pad2(a, rows, cols):
        return jnp.pad(a, ((0, rows - a.shape[0]), (0, cols - a.shape[1])))

    wh = jnp.concatenate([wa, wc], axis=1)          # [hidden, action_dim + 1]
    bh = jnp.concatenate([ba, bc], axis=1)          # [1, action_dim + 1]

    w1p = pad2(w1, state_dim, hp).astype(weight_dtype)   # keep state_dim rows
    b1p = pad2(b1, 1, hp).astype(jnp.float32)
    w2p = pad2(w2, hp, hp).astype(weight_dtype)
    b2p = pad2(b2, 1, hp).astype(jnp.float32)
    whp = pad2(wh, hp, op).astype(weight_dtype)
    bhp = pad2(bh, 1, op).astype(jnp.float32)

    return (w1p, b1p, w2p, b2p, whp, bhp), (hidden_dim, action_dim)


@functools.partial(jax.jit,
                   static_argnames=("action_dim", "batch_tile", "out_dtype"))
def actor_critic_forward_padded(x, padded_params, *, action_dim,
                                batch_tile=1024, out_dtype=jnp.float32):
    """x: [B, state_dim].  Returns (logits [B, action_dim], value [B, 1])."""
    w1p, b1p, w2p, b2p, whp, bhp = padded_params
    B, state_dim = x.shape
    assert state_dim == w1p.shape[0]
    hp = w2p.shape[0]
    op = whp.shape[1]

    # Batch tile: force a multiple of 8 sublanes; never larger than (rounded) B.
    # VMEM footprint per step ~ 2*tb*state_dim*4 + 2*tb*op*out_bytes
    #                          + weights (~140 KiB) + ~3*tb*hp*4 live f32
    # -> ~2.8 MiB at tb=1024; sweep 1024-4096 freely (limit raised below).
    tb = _round_up(min(batch_tile, B), 8)

    grid = (pl.cdiv(B, tb),)   # partial last block handled by Pallas masking

    resident = lambda i: (0, 0)   # weights/biases stay in VMEM across grid steps
    tiled = lambda i: (i, 0)      # x / output stream over the batch axis

    out_itemsize = jnp.dtype(out_dtype).itemsize
    flops = 2 * B * (state_dim * hp + hp * hp + hp * op)
    bytes_accessed = (x.size * x.dtype.itemsize
                      + sum(a.size * a.dtype.itemsize
                            for a in (w1p, b1p, w2p, b2p, whp, bhp))
                      + B * op * out_itemsize)

    out = pl.pallas_call(
        actor_critic_kernel,
        out_shape=jax.ShapeDtypeStruct((B, op), out_dtype),
        grid=grid,
        in_specs=[
            pl.BlockSpec((tb, state_dim), tiled),     # last dim == full array dim
            pl.BlockSpec((state_dim, hp), resident),
            pl.BlockSpec((1, hp), resident),
            pl.BlockSpec((hp, hp), resident),
            pl.BlockSpec((1, hp), resident),
            pl.BlockSpec((hp, op), resident),
            pl.BlockSpec((1, op), resident),
        ],
        out_specs=pl.BlockSpec((tb, op), tiled),
        compiler_params=pltpu.CompilerParams(
            # On v7x, if xprof shows one TensorCore idle, switch to
            # (pltpu.CORE_PARALLEL,) to force splitting the batch axis.
            dimension_semantics=("parallel",),
            # Headroom for batch-tile sweeps up to ~4096 on every generation
            # (safe vs. v7x's 64 MiB physical VMEM).
            vmem_limit_bytes=48 * 1024 * 1024),
        cost_estimate=pl.CostEstimate(flops=flops, transcendentals=0,
                                      bytes_accessed=bytes_accessed),
    )(x, w1p, b1p, w2p, b2p, whp, bhp)

    logits = out[:, :action_dim]
    value = out[:, action_dim:action_dim + 1]
    return logits, value


def actor_critic_forward(x, params, *, batch_tile=1024,
                         weight_dtype=jnp.float32, out_dtype=jnp.float32):
    """Convenience wrapper: pad/fuse params then run the Pallas kernel."""
    padded, (_, action_dim) = prepare_padded_params(params, weight_dtype)
    return actor_critic_forward_padded(x, padded, action_dim=action_dim,
                                       batch_tile=batch_tile,
                                       out_dtype=out_dtype)


def init_params(key, state_dim, action_dim, hidden_dim):
    """PyTorch-Linear-style init (uniform(-1/sqrt(fan_in), 1/sqrt(fan_in)))."""
    def linear(k, fan_in, fan_out):
        kw, kb = jax.random.split(k)
        bound = 1.0 / jnp.sqrt(fan_in)
        w = jax.random.uniform(kw, (fan_in, fan_out), jnp.float32, -bound, bound)
        b = jax.random.uniform(kb, (1, fan_out), jnp.float32, -bound, bound)
        return w, b

    k1, k2, ka, kc = jax.random.split(key, 4)
    w1, b1 = linear(k1, state_dim, hidden_dim)   # fc1
    w2, b2 = linear(k2, hidden_dim, hidden_dim)  # fc2
    wa, ba = linear(ka, hidden_dim, action_dim)  # fc_actor
    wc, bc = linear(kc, hidden_dim, 1)           # fc_critic
    return (w1, b1, w2, b2, wa, ba, wc, bc)


def reference_forward(x, params):
    w1, b1, w2, b2, wa, ba, wc, bc = params
    h1 = _leaky_relu(x @ w1 + b1)
    h2 = _leaky_relu(h1 @ w2 + b2)
    return h2 @ wa + ba, h2 @ wc + bc


if __name__ == "__main__":
    batch = 8
    state_dim = 16
    action_dim = 8
    hidden_dim = 32

    key = jax.random.PRNGKey(0)
    kx, kp = jax.random.split(key)
    x = jax.random.normal(kx, (batch, state_dim), jnp.float32)
    params = init_params(kp, state_dim, action_dim, hidden_dim)

    # ---- small-batch f32 correctness ----
    logits, value = actor_critic_forward(x, params)
    jax.block_until_ready((logits, value))
    ref_logits, ref_value = reference_forward(x, params)
    assert logits.shape == (batch, action_dim)
    assert value.shape == (batch, 1)
    assert jnp.allclose(logits, ref_logits, atol=1e-5, rtol=1e-5)
    assert jnp.allclose(value, ref_value, atol=1e-5, rtol=1e-5)

    # ---- larger batch: exercises the batch grid + partial last block ----
    xb = jax.random.normal(kx, (1000, state_dim), jnp.float32)
    rl, rv = reference_forward(xb, params)

    lb, vb = actor_critic_forward(xb, params, batch_tile=256)  # grid of 4, partial tail
    jax.block_until_ready((lb, vb))
    assert lb.shape == (1000, action_dim) and vb.shape == (1000, 1)
    assert jnp.allclose(lb, rl, atol=1e-5, rtol=1e-5)
    assert jnp.allclose(vb, rv, atol=1e-5, rtol=1e-5)

    lb2, vb2 = actor_critic_forward(xb, params, batch_tile=1024)  # single big tile
    jax.block_until_ready((lb2, vb2))
    assert jnp.allclose(lb2, rl, atol=1e-5, rtol=1e-5)
    assert jnp.allclose(vb2, rv, atol=1e-5, rtol=1e-5)

    # ---- true bf16 MXU path (weights + activation casts in-kernel) ----
    lbf, vbf = actor_critic_forward(xb, params, batch_tile=1024,
                                    weight_dtype=jnp.bfloat16)
    jax.block_until_ready((lbf, vbf))
    assert jnp.allclose(lbf, rl, atol=1e-1, rtol=5e-2)
    assert jnp.allclose(vbf, rv, atol=1e-1, rtol=5e-2)

    print("KERNEL_OK")
</pallas_src>

<mosaic_0001>
module attributes {stable_mosaic.version = 11 : i64} {
  func.func @actor_critic_kernel(%arg0: i32, %arg1: memref<8x16xf32, #tpu.memory_space<vmem>>, %arg2: memref<16x128xf32, #tpu.memory_space<vmem>>, %arg3: memref<1x128xf32, #tpu.memory_space<vmem>>, %arg4: memref<128x128xf32, #tpu.memory_space<vmem>>, %arg5: memref<1x128xf32, #tpu.memory_space<vmem>>, %arg6: memref<128x128xf32, #tpu.memory_space<vmem>>, %arg7: memref<1x128xf32, #tpu.memory_space<vmem>>, %arg8: memref<8x128xf32, #tpu.memory_space<vmem>>) attributes {dimension_semantics = [#tpu.dimension_semantics<parallel>], iteration_bounds = array<i64: 1>, scalar_prefetch = 0 : i64, scratch_operands = 0 : i64, tpu.core_type = #tpu.core_type<tc>, window_params = [{transform_indices = @transform_0, window_bounds = array<i64: 8, 16>}, {pipeline_mode = #tpu.pipeline_mode<synchronous>, transform_indices = @transform_1, window_bounds = array<i64: 16, 128>}, {pipeline_mode = #tpu.pipeline_mode<synchronous>, transform_indices = @transform_2, window_bounds = array<i64: 1, 128>}, {pipeline_mode = #tpu.pipeline_mode<synchronous>, transform_indices = @transform_3, window_bounds = array<i64: 128, 128>}, {pipeline_mode = #tpu.pipeline_mode<synchronous>, transform_indices = @transform_4, window_bounds = array<i64: 1, 128>}, {pipeline_mode = #tpu.pipeline_mode<synchronous>, transform_indices = @transform_5, window_bounds = array<i64: 128, 128>}, {pipeline_mode = #tpu.pipeline_mode<synchronous>, transform_indices = @transform_6, window_bounds = array<i64: 1, 128>}, {transform_indices = @transform_7, window_bounds = array<i64: 8, 128>}]} {
    %c0 = arith.constant 0 : index
    %c0_0 = arith.constant 0 : index
    %0 = vector.load %arg1[%c0, %c0_0] : memref<8x16xf32, #tpu.memory_space<vmem>>, vector<8x16xf32>
    %c0_1 = arith.constant 0 : index
    %c0_2 = arith.constant 0 : index
    %1 = vector.load %arg2[%c0_1, %c0_2] : memref<16x128xf32, #tpu.memory_space<vmem>>, vector<16x128xf32>
    %cst = arith.constant dense<0.000000e+00> : vector<8x128xf32>
    %2 = tpu.matmul %0, %1, %cst {dimension_numbers = #tpu.dot_dimension_numbers<[1], [0], [0], [1], [0, 0, 1, 1], [], []>} : vector<8x16xf32>, vector<16x128xf32>, vector<8x128xf32> -> vector<8x128xf32>
    %c0_3 = arith.constant 0 : index
    %c0_4 = arith.constant 0 : index
    %3 = vector.load %arg3[%c0_3, %c0_4] : memref<1x128xf32, #tpu.memory_space<vmem>>, vector<1x128xf32>
    %4 = vector.broadcast %3 : vector<1x128xf32> to vector<8x128xf32>
    %5 = arith.addf %2, %4 : vector<8x128xf32>
    %cst_5 = arith.constant 0.000000e+00 : f32
    %6 = vector.broadcast %cst_5 : f32 to vector<8x128xf32>
    %7 = arith.cmpf ogt, %5, %6 : vector<8x128xf32>
    %cst_6 = arith.constant 0.00999999977 : f32
    %8 = vector.broadcast %cst_6 : f32 to vector<8x128xf32>
    %9 = arith.mulf %8, %5 : vector<8x128xf32>
    %10 = arith.select %7, %5, %9 : vector<8x128xi1>, vector<8x128xf32>
    %c0_7 = arith.constant 0 : index
    %c0_8 = arith.constant 0 : index
    %11 = vector.load %arg4[%c0_7, %c0_8] : memref<128x128xf32, #tpu.memory_space<vmem>>, vector<128x128xf32>
    %cst_9 = arith.constant dense<0.000000e+00> : vector<8x128xf32>
    %12 = tpu.matmul %10, %11, %cst_9 {dimension_numbers = #tpu.dot_dimension_numbers<[1], [0], [0], [1], [0, 0, 1, 1], [], []>} : vector<8x128xf32>, vector<128x128xf32>, vector<8x128xf32> -> vector<8x128xf32>
    %c0_10 = arith.constant 0 : index
    %c0_11 = arith.constant 0 : index
    %13 = vector.load %arg5[%c0_10, %c0_11] : memref<1x128xf32, #tpu.memory_space<vmem>>, vector<1x128xf32>
    %14 = vector.broadcast %13 : vector<1x128xf32> to vector<8x128xf32>
    %15 = arith.addf %12, %14 : vector<8x128xf32>
    %cst_12 = arith.constant 0.000000e+00 : f32
    %16 = vector.broadcast %cst_12 : f32 to vector<8x128xf32>
    %17 = arith.cmpf ogt, %15, %16 : vector<8x128xf32>
    %cst_13 = arith.constant 0.00999999977 : f32
    %18 = vector.broadcast %cst_13 : f32 to vector<8x128xf32>
    %19 = arith.mulf %18, %15 : vector<8x128xf32>
    %20 = arith.select %17, %15, %19 : vector<8x128xi1>, vector<8x128xf32>
    %c0_14 = arith.constant 0 : index
    %c0_15 = arith.constant 0 : index
    %21 = vector.load %arg6[%c0_14, %c0_15] : memref<128x128xf32, #tpu.memory_space<vmem>>, vector<128x128xf32>
    %cst_16 = arith.constant dense<0.000000e+00> : vector<8x128xf32>
    %22 = tpu.matmul %20, %21, %cst_16 {dimension_numbers = #tpu.dot_dimension_numbers<[1], [0], [0], [1], [0, 0, 1, 1], [], []>} : vector<8x128xf32>, vector<128x128xf32>, vector<8x128xf32> -> vector<8x128xf32>
    %c0_17 = arith.constant 0 : index
    %c0_18 = arith.constant 0 : index
    %23 = vector.load %arg7[%c0_17, %c0_18] : memref<1x128xf32, #tpu.memory_space<vmem>>, vector<1x128xf32>
    %24 = vector.broadcast %23 : vector<1x128xf32> to vector<8x128xf32>
    %25 = arith.addf %22, %24 : vector<8x128xf32>
    %c0_19 = arith.constant 0 : index
    %c0_20 = arith.constant 0 : index
    %26 = vector.load %arg8[%c0_19, %c0_20] : memref<8x128xf32, #tpu.memory_space<vmem>>, vector<8x128xf32>
    tpu.vector_store %arg8[%c0_19, %c0_20], %25 {strides = array<i32>} : memref<8x128xf32, #tpu.memory_space<vmem>>, vector<8x128xf32>,
    return
  }
  func.func @transform_0(%arg0: i32) -> (i32, i32) {
    %c0_i32 = arith.constant 0 : i32
    %c0_i32_0 = arith.constant 0 : i32
    return %arg0, %c0_i32 : i32, i32
  }
  func.func @transform_1(%arg0: i32) -> (i32, i32) {
    %c0_i32 = arith.constant 0 : i32
    %c0_i32_0 = arith.constant 0 : i32
    %c0_i32_1 = arith.constant 0 : i32
    return %c0_i32, %c0_i32_0 : i32, i32
  }
  func.func @transform_2(%arg0: i32) -> (i32, i32) {
    %c0_i32 = arith.constant 0 : i32
    %c0_i32_0 = arith.constant 0 : i32
    %c0_i32_1 = arith.constant 0 : i32
    return %c0_i32, %c0_i32_0 : i32, i32
  }
  func.func @transform_3(%arg0: i32) -> (i32, i32) {
    %c0_i32 = arith.constant 0 : i32
    %c0_i32_0 = arith.constant 0 : i32
    %c0_i32_1 = arith.constant 0 : i32
    return %c0_i32, %c0_i32_0 : i32, i32
  }
  func.func @transform_4(%arg0: i32) -> (i32, i32) {
    %c0_i32 = arith.constant 0 : i32
    %c0_i32_0 = arith.constant 0 : i32
    %c0_i32_1 = arith.constant 0 : i32
    return %c0_i32, %c0_i32_0 : i32, i32
  }
  func.func @transform_5(%arg0: i32) -> (i32, i32) {
    %c0_i32 = arith.constant 0 : i32
    %c0_i32_0 = arith.constant 0 : i32
    %c0_i32_1 = arith.constant 0 : i32
    return %c0_i32, %c0_i32_0 : i32, i32
  }
  func.func @transform_6(%arg0: i32) -> (i32, i32) {
    %c0_i32 = arith.constant 0 : i32
    %c0_i32_0 = arith.constant 0 : i32
    %c0_i32_1 = arith.constant 0 : i32
    return %c0_i32, %c0_i32_0 : i32, i32
  }
  func.func @transform_7(%arg0: i32) -> (i32, i32) {
    %c0_i32 = arith.constant 0 : i32
    %c0_i32_0 = arith.constant 0 : i32
    return %arg0, %c0_i32 : i32, i32
  }
}

</mosaic_0001>

<llo_original>
// kernel: actor_critic_forward_padded.1
$region0: #{actor_critic_forward_padded.1}
  #allocation0 [shape = 'u32[]', space=smem, size = 0x4, offset = 0x4, fixed_abs, tag = 'smem constant byte address 0x4 - core index']
  #allocation1 [shape = 'u32[144,128]{1,0:T(1,128)}', space=vmem, size = 0x12000, scoped, tag = 'internal scratch']
  %s0 = inlined_call_operand.hbm [shape: f32[8,16], index: 0, kind: input, shape index: {}]
  %s1 = inlined_call_operand.hbm [shape: f32[16,128], index: 1, kind: input, shape index: {}]
  %s2 = inlined_call_operand.vmem [shape: f32[1,128], index: 2, kind: input, shape index: {}]
  %s3 = inlined_call_operand.hbm [shape: f32[128,128], index: 3, kind: input, shape index: {}]
  %s4 = inlined_call_operand.vmem [shape: f32[1,128], index: 4, kind: input, shape index: {}]
  %s5 = inlined_call_operand.hbm [shape: f32[128,128], index: 5, kind: input, shape index: {}]
  %s6 = inlined_call_operand.vmem [shape: f32[1,128], index: 6, kind: input, shape index: {}]
  %s7 = inlined_call_operand.vmem [shape: f32[8,128], index: 7, kind: output, shape index: {}]
  %s8 = sld [smem:[#allocation0]]
  $region54: #{actor_critic_forward_padded.1} parent=0
    _
  %s10 = ssub.s32 1, %s8
  %s11 = scalar_select 0, %s10, %s8
  $region1: #{actor_critic_forward_padded.1} parent=0
    #allocation2 [shape = 'u8[4096]{0}', space=vmem, size = 0x1000, scoped, tag = 'input window, operand 0, single buffered']
    #allocation3 [shape = 's32[1]{0}', space=sflag, size = 0x4, scoped, tag = 'scoped memory for actor_critic_forward_padded.1']
    #allocation4 [shape = 'u8[8192]{0}', space=vmem, size = 0x2000, scoped, tag = 'input window, operand 1, single buffered']
    #allocation5 [shape = 's32[1]{0}', space=sflag, size = 0x4, scoped, tag = 'scoped memory for actor_critic_forward_padded.1']
    #allocation6 [shape = 'u8[65536]{0}', space=vmem, size = 0x10000, scoped, tag = 'input window, operand 3, single buffered']
    #allocation7 [shape = 'u8[65536]{0}', space=vmem, size = 0x10000, scoped, tag = 'input window, operand 5, single buffered']
    #allocation8 [shape = 's32[1]{0}', space=sflag, size = 0x4, scoped, tag = 'scoped memory for actor_critic_forward_padded.1']
    %12 = vsyncpa [#allocation3], 0
    %13 = vsyncpa [#allocation5], 0
    %14 = vsyncpa [#allocation8], 0
    // Predicated region
    $region2: #{actor_critic_forward_padded.1} parent=1 // pred_check
      _
    $region3: #{actor_critic_forward_padded.1} parent=1 // pred_check_branch
      %16 = sbr.rel (0) target = $region5
    $region4: #{actor_critic_forward_padded.1} parent=1 // pred_region
      %s18 = ssub.s32 128, 128
      %19 = vsyncadd [#allocation3], %s18
      %s21 = sshll.u32 [#allocation2], 4
      %s22 = int_to_ptr.vmem [resolvable:$true] %s21
      %24 = dma.hbm_to_vmem [thread:$0]  %s0, 128, %s22, [#allocation3]
    $region5: #{actor_critic_forward_padded.1} parent=1 // pred_fallthru
      _
    // Predicated region
    $region6: #{actor_critic_forward_padded.1} parent=1 // pred_check
      _
    $region7: #{actor_critic_forward_padded.1} parent=1 // pred_check_branch
      %26 = sbr.rel (0) target = $region9
    $region8: #{actor_critic_forward_padded.1} parent=1 // pred_region
      %s28 = ssub.s32 256, 256
      %29 = vsyncadd [#allocation5], %s28
      %s30 = sshll.u32 [#allocation4], 4
      %s31 = int_to_ptr.vmem [resolvable:$true] %s30
      %36 = dma.hbm_to_vmem [thread:$0]  %s1, 256, %s31, [#allocation5], 128, 128, 8
    $region9: #{actor_critic_forward_padded.1} parent=1 // pred_fallthru
      _
    // Predicated region
    $region10: #{actor_critic_forward_padded.1} parent=1 // pred_check
      _
    $region11: #{actor_critic_forward_padded.1} parent=1 // pred_check_branch
      %38 = sbr.rel (0) target = $region13
    $region12: #{actor_critic_forward_padded.1} parent=1 // pred_region
      _
    $region13: #{actor_critic_forward_padded.1} parent=1 // pred_fallthru
      _
    // Predicated region
    $region14: #{actor_critic_forward_padded.1} parent=1 // pred_check
      _
    $region15: #{actor_critic_forward_padded.1} parent=1 // pred_check_branch
      %40 = sbr.rel (0) target = $region17
    $region16: #{actor_critic_forward_padded.1} parent=1 // pred_region
      %s42 = ssub.s32 2048, 2048
      %43 = vsyncadd [#allocation5], %s42
      %s44 = sshll.u32 [#allocation6], 4
      %s45 = int_to_ptr.vmem [resolvable:$true] %s44
      %50 = dma.hbm_to_vmem [thread:$0]  %s3, 2048, %s45, [#allocation5], 128, 128, 8
    $region17: #{actor_critic_forward_padded.1} parent=1 // pred_fallthru
      _
    // Predicated region
    $region18: #{actor_critic_forward_padded.1} parent=1 // pred_check
      _
    $region19: #{actor_critic_forward_padded.1} parent=1 // pred_check_branch
      %52 = sbr.rel (0) target = $region21
    $region20: #{actor_critic_forward_padded.1} parent=1 // pred_region
      _
    $region21: #{actor_critic_forward_padded.1} parent=1 // pred_fallthru
      _
    // Predicated region
    $region22: #{actor_critic_forward_padded.1} parent=1 // pred_check
      _
    $region23: #{actor_critic_forward_padded.1} parent=1 // pred_check_branch
      %54 = sbr.rel (0) target = $region25
    $region24: #{actor_critic_forward_padded.1} parent=1 // pred_region
      %s56 = ssub.s32 2048, 2048
      %57 = vsyncadd [#allocation8], %s56
      %s58 = sshll.u32 [#allocation7], 4
      %s59 = int_to_ptr.vmem [resolvable:$true] %s58
      %64 = dma.hbm_to_vmem [thread:$0]  %s5, 2048, %s59, [#allocation8], 128, 128, 8
    $region25: #{actor_critic_forward_padded.1} parent=1 // pred_fallthru
      _
    // Predicated region
    $region26: #{actor_critic_forward_padded.1} parent=1 // pred_check
      _
    $region27: #{actor_critic_forward_padded.1} parent=1 // pred_check_branch
      %66 = sbr.rel (0) target = $region29
    $region28: #{actor_critic_forward_padded.1} parent=1 // pred_region
      _
    $region29: #{actor_critic_forward_padded.1} parent=1 // pred_fallthru
      _
    // Predicated region
    $region30: #{actor_critic_forward_padded.1} parent=1 // pred_check
      _
    $region31: #{actor_critic_forward_padded.1} parent=1 // pred_check_branch
      %68 = sbr.rel (0) target = $region33
    $region32: #{actor_critic_forward_padded.1} parent=1 // pred_region
      %69 = dma.done [#allocation3], 128
    $region33: #{actor_critic_forward_padded.1} parent=1 // pred_fallthru
      _
    // Predicated region
    $region34: #{actor_critic_forward_padded.1} parent=1 // pred_check
      _
    $region35: #{actor_critic_forward_padded.1} parent=1 // pred_check_branch
      %71 = sbr.rel (0) target = $region37
    $region36: #{actor_critic_forward_padded.1} parent=1 // pred_region
      %72 = dma.done [#allocation5], 256
    $region37: #{actor_critic_forward_padded.1} parent=1 // pred_fallthru
      _
    // Predicated region
    $region38: #{actor_critic_forward_padded.1} parent=1 // pred_check
      _
    $region39: #{actor_critic_forward_padded.1} parent=1 // pred_check_branch
      %74 = sbr.rel (0) target = $region41
    $region40: #{actor_critic_forward_padded.1} parent=1 // pred_region
      %75 = dma.done [#allocation5], 2048
    $region41: #{actor_critic_forward_padded.1} parent=1 // pred_fallthru
      _
    // Predicated region
    $region42: #{actor_critic_forward_padded.1} parent=1 // pred_check
      _
    $region43: #{actor_critic_forward_padded.1} parent=1 // pred_check_branch
      %77 = sbr.rel (0) target = $region45
    $region44: #{actor_critic_forward_padded.1} parent=1 // pred_region
      %78 = dma.done [#allocation8], 2048
    $region45: #{actor_critic_forward_padded.1} parent=1 // pred_fallthru
      _
    %v79 = vld [vmem:[#allocation2] sm:$0xff]
    %v80 = vld [vmem:[#allocation4] sm:$0xff]
    %v81 = vld [vmem:[#allocation4 + $0x8] sm:$0xff]
    %v82 = vld [vmem:[%s2] sm:$0x1]
    %v84 = vlaneseq
    %v85 = vshrl.u32 %v84, 7
    %v86 = vsub.s32 0, %v85
    %v87 = vrot.slane %v82, %v86
    %vm89 = vcmask 130048
    %v91 = vsel %vm89, %v79, 0
    %93 = vmatprep.subr.mxu0 0.0
    %94 = vmatpush1.msra.mxu0 %v80
    %95 = vmatprep.subr.mxu0 0.0
    %96 = vmatpush1.msra.mxu0 %v81
    %97 = vmatprep.subr.mxu0 0.0
    %98 = vmatpush1.msra.mxu0 0.0
    %99 = vmatprep.subr.mxu0 0.0
    %100 = vmatpush1.msra.mxu0 0.0
    %101 = vmatprep.subr.mxu0 0.0
    %102 = vmatpush1.msra.mxu0 0.0
    %103 = vmatprep.subr.mxu0 0.0
    %104 = vmatpush1.msra.mxu0 0.0
    %105 = vmatprep.subr.mxu0 0.0
    %106 = vmatpush1.msra.mxu0 0.0
    %107 = vmatprep.subr.mxu0 0.0
    %108 = vmatpush1.msra.mxu0 0.0
    %109 = vmatprep.subr.mxu0 0.0
    %110 = vmatpush1.msra.mxu0 0.0
    %111 = vmatprep.subr.mxu0 0.0
    %112 = vmatpush1.msra.mxu0 0.0
    %113 = vmatprep.subr.mxu0 0.0
    %114 = vmatpush1.msra.mxu0 0.0
    %115 = vmatprep.subr.mxu0 0.0
    %116 = vmatpush1.msra.mxu0 0.0
    %117 = vmatprep.subr.mxu0 0.0
    %118 = vmatpush1.msra.mxu0 0.0
    %119 = vmatprep.subr.mxu0 0.0
    %120 = vmatpush1.msra.mxu0 0.0
    %121 = vmatprep.subr.mxu0 0.0
    %122 = vmatpush1.msra.mxu0 0.0
    %123 = vmatprep.subr.mxu0 0.0
    %124 = vmatpush1.msra.mxu0 0.0
    %125 = vmatprep.subr.mxu0 0.0
    %126 = vmatpush1.msra.mxu0 0.0
    %127 = vmatprep.subr.mxu0 0.0
    %128 = vmatpush1.msra.mxu0 0.0
    %129 = vmatprep.subr.mxu0 0.0
    %130 = vmatpush1.msra.mxu0 0.0
    %131 = vmatprep.subr.mxu0 0.0
    %132 = vmatpush1.msra.mxu0 0.0
    %133 = vmatprep.subr.mxu0 0.0
    %134 = vmatpush1.msra.mxu0 0.0
    %135 = vmatprep.subr.mxu0 0.0
    %136 = vmatpush1.msra.mxu0 0.0
    %137 = vmatprep.subr.mxu0 0.0
    %138 = vmatpush1.msra.mxu0 0.0
    %139 = vmatprep.subr.mxu0 0.0
    %140 = vmatpush1.msra.mxu0 0.0
    %141 = vmatprep.subr.mxu0 0.0
    %142 = vmatpush1.msra.mxu0 0.0
    %143 = vmatprep.subr.mxu0 0.0
    %144 = vmatpush1.msra.mxu0 0.0
    %145 = vmatprep.subr.mxu0 0.0
    %146 = vmatpush1.msra.mxu0 0.0
    %147 = vmatprep.subr.mxu0 0.0
    %148 = vmatpush1.msra.mxu0 0.0
    %149 = vmatprep.subr.mxu0 0.0
    %150 = vmatpush1.msra.mxu0 0.0
    %151 = vmatprep.subr.mxu0 0.0
    %152 = vmatpush1.msra.mxu0 0.0
    %153 = vmatprep.subr.mxu0 0.0
    %154 = vmatpush1.msra.mxu0 0.0
    %155 = vmatprep.subr.mxu0 0.0
    %156 = vmatpush1.msra.mxu0 0.0
    %157 = vmatprep.mubr.f32.mxu0 0.0
    %158 = vmatmul.mubr.f32.gmra.mrb[0].mxu0 %v91
    %v159 = vpop.f32.mrb[0].mxu0
    %v160 = vadd.f32 %v87, %v159
    %v161 = vpop.f32.mrb[0].mxu0
    %162 = vdwg.mxu0
    %vm163 = vcmp.gt.f32.partialorder %v160, 0.0
    %v164 = vmul.f32 %v160, 0.01
    %v165 = vsel %vm163, %v160, %v164
    %v166 = vld [vmem:[#allocation6] sm:$0xff]
    %v167 = vld [vmem:[#allocation6 + $0x8] sm:$0xff]
    %v168 = vld [vmem:[#allocation6 + $0x10] sm:$0xff]
    %v169 = vld [vmem:[#allocation6 + $0x18] sm:$0xff]
    %v170 = vld [vmem:[#allocation6 + $0x20] sm:$0xff]
    %v171 = vld [vmem:[#allocation6 + $0x28] sm:$0xff]
    %v172 = vld [vmem:[#allocation6 + $0x30] sm:$0xff]
    %v173 = vld [vmem:[#allocation6 + $0x38] sm:$0xff]
    %v174 = vld [vmem:[#allocation6 + $0x40] sm:$0xff]
    %v175 = vld [vmem:[#allocation6 + $0x48] sm:$0xff]
    %v176 = vld [vmem:[#allocation6 + $0x50] sm:$0xff]
    %v177 = vld [vmem:[#allocation6 + $0x58] sm:$0xff]
    %v178 = vld [vmem:[#allocation6 + $0x60] sm:$0xff]
    %v179 = vld [vmem:[#allocation6 + $0x68] sm:$0xff]
    %v180 = vld [vmem:[#allocation6 + $0x70] sm:$0xff]
    %v181 = vld [vmem:[#allocation6 + $0x78] sm:$0xff]
    %v182 = vld [vmem:[%s4] sm:$0x1]
    %v184 = vlaneseq
    %v185 = vshrl.u32 %v184, 7
    %v186 = vsub.s32 0, %v185
    %v187 = vrot.slane %v182, %v186
    %189 = vmatprep.subr.mxu0 0.0
    %190 = vmatpush1.msra.mxu0 %v166
    %191 = vmatprep.subr.mxu0 0.0
    %192 = vmatpush1.msra.mxu0 %v167
    %193 = vmatprep.subr.mxu0 0.0
    %194 = vmatpush1.msra.mxu0 %v168
    %195 = vmatprep.subr.mxu0 0.0
    %196 = vmatpush1.msra.mxu0 %v169
    %197 = vmatprep.subr.mxu0 0.0
    %198 = vmatpush1.msra.mxu0 %v170
    %199 = vmatprep.subr.mxu0 0.0
    %200 = vmatpush1.msra.mxu0 %v171
    %201 = vmatprep.subr.mxu0 0.0
    %202 = vmatpush1.msra.mxu0 %v172
    %203 = vmatprep.subr.mxu0 0.0
    %204 = vmatpush1.msra.mxu0 %v173
    %205 = vmatprep.subr.mxu0 0.0
    %206 = vmatpush1.msra.mxu0 %v174
    %207 = vmatprep.subr.mxu0 0.0
    %208 = vmatpush1.msra.mxu0 %v175
    %209 = vmatprep.subr.mxu0 0.0
    %210 = vmatpush1.msra.mxu0 %v176
    %211 = vmatprep.subr.mxu0 0.0
    %212 = vmatpush1.msra.mxu0 %v177
    %213 = vmatprep.subr.mxu0 0.0
    %214 = vmatpush1.msra.mxu0 %v178
    %215 = vmatprep.subr.mxu0 0.0
    %216 = vmatpush1.msra.mxu0 %v179
    %217 = vmatprep.subr.mxu0 0.0
    %218 = vmatpush1.msra.mxu0 %v180
    %219 = vmatprep.subr.mxu0 0.0
    %220 = vmatpush1.msra.mxu0 %v181
    %221 = vmatprep.subr.mxu0 0.0
    %222 = vmatpush1.msra.mxu0 0.0
    %223 = vmatprep.subr.mxu0 0.0
    %224 = vmatpush1.msra.mxu0 0.0
    %225 = vmatprep.subr.mxu0 0.0
    %226 = vmatpush1.msra.mxu0 0.0
    %227 = vmatprep.subr.mxu0 0.0
    %228 = vmatpush1.msra.mxu0 0.0
    %229 = vmatprep.subr.mxu0 0.0
    %230 = vmatpush1.msra.mxu0 0.0
    %231 = vmatprep.subr.mxu0 0.0
    %232 = vmatpush1.msra.mxu0 0.0
    %233 = vmatprep.subr.mxu0 0.0
    %234 = vmatpush1.msra.mxu0 0.0
    %235 = vmatprep.subr.mxu0 0.0
    %236 = vmatpush1.msra.mxu0 0.0
    %237 = vmatprep.subr.mxu0 0.0
    %238 = vmatpush1.msra.mxu0 0.0
    %239 = vmatprep.subr.mxu0 0.0
    %240 = vmatpush1.msra.mxu0 0.0
    %241 = vmatprep.subr.mxu0 0.0
    %242 = vmatpush1.msra.mxu0 0.0
    %243 = vmatprep.subr.mxu0 0.0
    %244 = vmatpush1.msra.mxu0 0.0
    %245 = vmatprep.subr.mxu0 0.0
    %246 = vmatpush1.msra.mxu0 0.0
    %247 = vmatprep.subr.mxu0 0.0
    %248 = vmatpush1.msra.mxu0 0.0
    %249 = vmatprep.subr.mxu0 0.0
    %250 = vmatpush1.msra.mxu0 0.0
    %251 = vmatprep.subr.mxu0 0.0
    %252 = vmatpush1.msra.mxu0 0.0
    %253 = vmatprep.mubr.f32.mxu0 0.0
    %254 = vmatmul.mubr.f32.gmra.mrb[0].mxu0 %v165
    %v255 = vpop.f32.mrb[0].mxu0
    %v256 = vadd.f32 %v187, %v255
    %v257 = vpop.f32.mrb[0].mxu0
    %258 = vdwg.mxu0
    %vm259 = vcmp.gt.f32.partialorder %v256, 0.0
    %v260 = vmul.f32 %v256, 0.01
    %v261 = vsel %vm259, %v256, %v260
    %v262 = vld [vmem:[#allocation7] sm:$0xff]
    %v263 = vld [vmem:[#allocation7 + $0x8] sm:$0xff]
    %v264 = vld [vmem:[#allocation7 + $0x10] sm:$0xff]
    %v265 = vld [vmem:[#allocation7 + $0x18] sm:$0xff]
    %v266 = vld [vmem:[#allocation7 + $0x20] sm:$0xff]
    %v267 = vld [vmem:[#allocation7 + $0x28] sm:$0xff]
    %v268 = vld [vmem:[#allocation7 + $0x30] sm:$0xff]
    %v269 = vld [vmem:[#allocation7 + $0x38] sm:$0xff]
    %v270 = vld [vmem:[#allocation7 + $0x40] sm:$0xff]
    %v271 = vld [vmem:[#allocation7 + $0x48] sm:$0xff]
    %v272 = vld [vmem:[#allocation7 + $0x50] sm:$0xff]
    %v273 = vld [vmem:[#allocation7 + $0x58] sm:$0xff]
    %v274 = vld [vmem:[#allocation7 + $0x60] sm:$0xff]
    %v275 = vld [vmem:[#allocation7 + $0x68] sm:$0xff]
    %v276 = vld [vmem:[#allocation7 + $0x70] sm:$0xff]
    %v277 = vld [vmem:[#allocation7 + $0x78] sm:$0xff]
    %v278 = vld [vmem:[%s6] sm:$0x1]
    %v280 = vlaneseq
    %v281 = vshrl.u32 %v280, 7
    %v282 = vsub.s32 0, %v281
    %v283 = vrot.slane %v278, %v282
    %285 = vmatprep.subr.mxu0 0.0
    %286 = vmatpush1.msra.mxu0 %v262
    %287 = vmatprep.subr.mxu0 0.0
    %288 = vmatpush1.msra.mxu0 %v263
    %289 = vmatprep.subr.mxu0 0.0
    %290 = vmatpush1.msra.mxu0 %v264
    %291 = vmatprep.subr.mxu0 0.0
    %292 = vmatpush1.msra.mxu0 %v265
    %293 = vmatprep.subr.mxu0 0.0
    %294 = vmatpush1.msra.mxu0 %v266
    %295 = vmatprep.subr.mxu0 0.0
    %296 = vmatpush1.msra.mxu0 %v267
    %297 = vmatprep.subr.mxu0 0.0
    %298 = vmatpush1.msra.mxu0 %v268
    %299 = vmatprep.subr.mxu0 0.0
    %300 = vmatpush1.msra.mxu0 %v269
    %301 = vmatprep.subr.mxu0 0.0
    %302 = vmatpush1.msra.mxu0 %v270
    %303 = vmatprep.subr.mxu0 0.0
    %304 = vmatpush1.msra.mxu0 %v271
    %305 = vmatprep.subr.mxu0 0.0
    %306 = vmatpush1.msra.mxu0 %v272
    %307 = vmatprep.subr.mxu0 0.0
    %308 = vmatpush1.msra.mxu0 %v273
    %309 = vmatprep.subr.mxu0 0.0
    %310 = vmatpush1.msra.mxu0 %v274
    %311 = vmatprep.subr.mxu0 0.0
    %312 = vmatpush1.msra.mxu0 %v275
    %313 = vmatprep.subr.mxu0 0.0
    %314 = vmatpush1.msra.mxu0 %v276
    %315 = vmatprep.subr.mxu0 0.0
    %316 = vmatpush1.msra.mxu0 %v277
    %317 = vmatprep.subr.mxu0 0.0
    %318 = vmatpush1.msra.mxu0 0.0
    %319 = vmatprep.subr.mxu0 0.0
    %320 = vmatpush1.msra.mxu0 0.0
    %321 = vmatprep.subr.mxu0 0.0
    %322 = vmatpush1.msra.mxu0 0.0
    %323 = vmatprep.subr.mxu0 0.0
    %324 = vmatpush1.msra.mxu0 0.0
    %325 = vmatprep.subr.mxu0 0.0
    %326 = vmatpush1.msra.mxu0 0.0
    %327 = vmatprep.subr.mxu0 0.0
    %328 = vmatpush1.msra.mxu0 0.0
    %329 = vmatprep.subr.mxu0 0.0
    %330 = vmatpush1.msra.mxu0 0.0
    %331 = vmatprep.subr.mxu0 0.0
    %332 = vmatpush1.msra.mxu0 0.0
    %333 = vmatprep.subr.mxu0 0.0
    %334 = vmatpush1.msra.mxu0 0.0
    %335 = vmatprep.subr.mxu0 0.0
    %336 = vmatpush1.msra.mxu0 0.0
    %337 = vmatprep.subr.mxu0 0.0
    %338 = vmatpush1.msra.mxu0 0.0
    %339 = vmatprep.subr.mxu0 0.0
    %340 = vmatpush1.msra.mxu0 0.0
    %341 = vmatprep.subr.mxu0 0.0
    %342 = vmatpush1.msra.mxu0 0.0
    %343 = vmatprep.subr.mxu0 0.0
    %344 = vmatpush1.msra.mxu0 0.0
    %345 = vmatprep.subr.mxu0 0.0
    %346 = vmatpush1.msra.mxu0 0.0
    %347 = vmatprep.subr.mxu0 0.0
    %348 = vmatpush1.msra.mxu0 0.0
    %349 = vmatprep.mubr.f32.mxu0 0.0
    %350 = vmatmul.mubr.f32.gmra.mrb[0].mxu0 %v261
    %v351 = vpop.f32.mrb[0].mxu0
    %v352 = vadd.f32 %v283, %v351
    %v353 = vpop.f32.mrb[0].mxu0
    %354 = vdwg.mxu0
    %355 = vst [vmem:[%s7] sm:$0xff] %v352
    // Predicated region
    $region46: #{actor_critic_forward_padded.1} parent=1 // pred_check
      _
    $region47: #{actor_critic_forward_padded.1} parent=1 // pred_check_branch
      %357 = sbr.rel (0) target = $region49
    $region48: #{actor_critic_forward_padded.1} parent=1 // pred_region
      _
    $region49: #{actor_critic_forward_padded.1} parent=1 // pred_fallthru
      _
    // Predicated region
    $region50: #{actor_critic_forward_padded.1} parent=1 // pred_check
      _
    $region51: #{actor_critic_forward_padded.1} parent=1 // pred_check_branch
      %359 = sbr.rel (0) target = $region53
    $region52: #{actor_critic_forward_padded.1} parent=1 // pred_region
      _
    $region53: #{actor_critic_forward_padded.1} parent=1 // pred_fallthru
      _
    %360 = vsyncpa [#allocation3], 1
    %361 = vsyncpa [#allocation5], 1
    %362 = vsyncpa [#allocation8], 1

</llo_original>
